<compile_context>
chip_gen: v6e
topology: v6e:2x2x1
jax: 0.10.0
libtpu: 0.0.40
codegen_flags: <defaults>
</compile_context>

<pallas_src>
import functools

import jax
import jax.numpy as jnp
from jax import lax
from jax.experimental import pallas as pl
from jax.experimental.pallas import tpu as pltpu


def _silu(x):
    return x * jax.nn.sigmoid(x)


def _round_up(x, m):
    return ((x + m - 1) // m) * m


def resconv1d_kernel(x_ref, halo_ref, w1_ref, b1_ref, w2_ref, b2_ref, o_ref):
    """One (batch, L-tile) per grid step.

    x_ref    : (1, tL, C_pad)    non-overlapping input tile, f32, zero outside [0, L)
    halo_ref : (1, 1, 8, C_pad)  row 0 = input row (tile_start - 1),
                                 row 1 = input row (tile_start + tL),
                                 zero outside [0, L); rows 2..7 are padding.
    w1_ref   : (3, C_pad, S_pad) conv1 taps (tap k = torch weight[:, :, k].T), compute dtype
    b1_ref   : (1, S_pad)        f32
    w2_ref   : (S_pad, C_pad)    conv2 1x1 (torch weight[:, :, 0].T), compute dtype
    b2_ref   : (1, C_pad)        f32
    o_ref    : (1, tL, C_pad)
    """
    tL, C_pad = o_ref.shape[1], o_ref.shape[2]
    cd = w1_ref.dtype                         # MXU operand dtype (bf16 or f32)

    x = x_ref[0]                              # (tL, C_pad) f32   (also the residual)
    a = _silu(x)                              # activation1 in f32 (silu(0) == 0)

    # halo rows (already zero where the conv padding is zero), broadcast over sublanes
    halo = _silu(halo_ref[0, 0])              # (8, C_pad)
    hp = jnp.broadcast_to(halo[0:1, :], (tL, C_pad))   # silu(x[tile_start - 1])
    hn = jnp.broadcast_to(halo[1:2, :], (tL, C_pad))   # silu(x[tile_start + tL])

    # 3-tap operands: XLU sublane rolls + one-row boundary fix via VPU select.
    #   roll(a, 1)[i]      == a[i-1]   (wrong only at i == 0     -> use hp)
    #   roll(a, tL - 1)[i] == a[i+1]   (wrong only at i == tL-1  -> use hn)
    row = lax.broadcasted_iota(jnp.int32, (tL, C_pad), 0)
    a_prev = jnp.where(row == 0, hp, pltpu.roll(a, 1, axis=0))
    a_next = jnp.where(row == tL - 1, hn, pltpu.roll(a, tL - 1, axis=0))

    # conv1 (k=3, pad=1, dilation=1): three MXU matmuls, f32 accumulation.
    y = (jnp.dot(a_prev.astype(cd), w1_ref[0], preferred_element_type=jnp.float32)
         + jnp.dot(a.astype(cd), w1_ref[1], preferred_element_type=jnp.float32)
         + jnp.dot(a_next.astype(cd), w1_ref[2], preferred_element_type=jnp.float32)
         + b1_ref[...])                       # (tL, S_pad) f32

    z = _silu(y)                              # activation2 in f32

    # conv2 (1x1) + bias + residual (residual = raw tile, f32).
    out = jnp.dot(z.astype(cd), w2_ref[...],
                  preferred_element_type=jnp.float32) + b2_ref[...]
    o_ref[0] = (out + x).astype(o_ref.dtype)


@functools.partial(jax.jit, static_argnames=("tile_l", "compute_dtype"))
def resconv1d_block(x_ncl, w1, b1, w2, b2, *, tile_l=512,
                    compute_dtype=jnp.bfloat16):
    """x_ncl: (B, n_in, L) float32 — same layout as the PyTorch module.

    w1: (n_state, n_in, 3)  conv1.weight (torch layout)
    b1: (n_state,)          conv1.bias
    w2: (n_in, n_state, 1)  conv2.weight
    b2: (n_in,)             conv2.bias
    Returns (B, n_in, L).
    """
    B, C, L = x_ncl.shape
    S = w1.shape[0]

    # lane-dense channel padding + sublane-multiple L tiling
    C_pad = _round_up(C, 128)
    S_pad = _round_up(S, 128)
    tL = min(_round_up(tile_l, 8), _round_up(L, 8))
    nT = -(-L // tL)
    L_round = nT * tL

    # channels-last, f32, zero-padded channels & tail rows (non-overlapping tiles).
    x_nlc = jnp.transpose(x_ncl, (0, 2, 1)).astype(jnp.float32)          # (B, L, C)
    x_pad = jnp.pad(x_nlc, ((0, 0), (0, L_round - L), (0, C_pad - C)))   # (B, L_round, C_pad)

    # Tiny per-tile halo rows (2 useful rows per tile, padded to 8 sublanes):
    #   halo[b, l, 0] = x[b, l*tL - 1]      (zero for l == 0)
    #   halo[b, l, 1] = x[b, (l+1)*tL]      (zero past the end of x)
    zero_row = jnp.zeros((B, 1, C_pad), jnp.float32)
    prev_rows = jnp.concatenate(
        [zero_row, x_pad[:, tL - 1:L_round - 1:tL, :]], axis=1)          # (B, nT, C_pad)
    next_rows = jnp.concatenate(
        [x_pad[:, tL::tL, :], zero_row], axis=1)                         # (B, nT, C_pad)
    halo = jnp.stack([prev_rows, next_rows], axis=2)                     # (B, nT, 2, C_pad)
    halo = jnp.pad(halo, ((0, 0), (0, 0), (0, 6), (0, 0)))               # (B, nT, 8, C_pad)

    # repack weights for channels-last matmuls; operands in compute dtype, biases f32.
    w1_taps = jnp.pad(jnp.transpose(w1, (2, 1, 0)),                      # (3, C, S)
                      ((0, 0), (0, C_pad - C), (0, S_pad - S))).astype(compute_dtype)
    b1_row = jnp.pad(b1, (0, S_pad - S)).reshape(1, S_pad).astype(jnp.float32)
    w2_mat = jnp.pad(jnp.transpose(w2[:, :, 0], (1, 0)),                 # (S, C)
                     ((0, S_pad - S), (0, C_pad - C))).astype(compute_dtype)
    b2_row = jnp.pad(b2, (0, C_pad - C)).reshape(1, C_pad).astype(jnp.float32)

    out_nlc = pl.pallas_call(
        resconv1d_kernel,
        out_shape=jax.ShapeDtypeStruct((B, L_round, C_pad), x_ncl.dtype),
        grid_spec=pltpu.PrefetchScalarGridSpec(
            num_scalar_prefetch=0,
            grid=(B, nT),
            in_specs=[
                pl.BlockSpec((1, tL, C_pad), lambda b, l: (b, l, 0)),
                pl.BlockSpec((1, 1, 8, C_pad), lambda b, l: (b, l, 0, 0)),
                pl.BlockSpec((3, C_pad, S_pad), lambda b, l: (0, 0, 0)),
                pl.BlockSpec((1, S_pad), lambda b, l: (0, 0)),
                pl.BlockSpec((S_pad, C_pad), lambda b, l: (0, 0)),
                pl.BlockSpec((1, C_pad), lambda b, l: (0, 0)),
            ],
            out_specs=pl.BlockSpec((1, tL, C_pad), lambda b, l: (b, l, 0)),
        ),
        compiler_params=pltpu.CompilerParams(
            dimension_semantics=("parallel", "parallel")),
    )(x_pad, halo, w1_taps, b1_row, w2_mat, b2_row)

    # drop channel/length padding, back to NCL
    return jnp.transpose(out_nlc[:, :L, :C], (0, 2, 1)).astype(x_ncl.dtype)


def _reference(x_ncl, w1, b1, w2, b2):
    """Pure-JAX f32 reference using lax.conv_general_dilated (NCL layout)."""
    h = _silu(x_ncl)
    y = lax.conv_general_dilated(
        h, w1, window_strides=(1,), padding=((1, 1),),
        dimension_numbers=("NCH", "OIH", "NCH")) + b1[None, :, None]
    z = _silu(y)
    o = lax.conv_general_dilated(
        z, w2, window_strides=(1,), padding=((0, 0),),
        dimension_numbers=("NCH", "OIH", "NCH")) + b2[None, :, None]
    return o + x_ncl


if __name__ == "__main__":
    B, n_in, n_state, L = 2, 8, 32, 150   # L deliberately not a multiple of the tile

    key = jax.random.PRNGKey(0)
    kx, kw1, kb1, kw2, kb2 = jax.random.split(key, 5)

    x = jax.random.normal(kx, (B, n_in, L), dtype=jnp.float32)
    # Deterministic synthetic parameters (PyTorch Conv1d shapes).
    w1 = 0.1 * jax.random.normal(kw1, (n_state, n_in, 3), dtype=jnp.float32)
    b1 = 0.1 * jax.random.normal(kb1, (n_state,), dtype=jnp.float32)
    w2 = 0.1 * jax.random.normal(kw2, (n_in, n_state, 1), dtype=jnp.float32)
    b2 = 0.1 * jax.random.normal(kb2, (n_in,), dtype=jnp.float32)

    ref = _reference(x, w1, b1, w2, b2)

    # 1) bf16 MXU operands (default fast path), multiple L tiles.
    out_bf16 = jax.block_until_ready(
        resconv1d_block(x, w1, b1, w2, b2, tile_l=64,
                        compute_dtype=jnp.bfloat16))
    assert out_bf16.shape == ref.shape == (B, n_in, L)
    assert jnp.allclose(out_bf16, ref, atol=2e-2, rtol=2e-2), "bf16 path mismatch"

    # 2) f32 operands, multiple L tiles — exact structural check (halo/roll/where path).
    out_f32 = jax.block_until_ready(
        resconv1d_block(x, w1, b1, w2, b2, tile_l=64,
                        compute_dtype=jnp.float32))
    assert jnp.allclose(out_f32, ref, atol=1e-4, rtol=1e-4), "f32 tiled path mismatch"

    # 3) f32 operands, single L tile (tile larger than L) — edge-path check.
    out_one = jax.block_until_ready(
        resconv1d_block(x, w1, b1, w2, b2, tile_l=512,
                        compute_dtype=jnp.float32))
    assert jnp.allclose(out_one, ref, atol=1e-4, rtol=1e-4), "single-tile path mismatch"

    print("KERNEL_OK")
</pallas_src>

<mosaic_0001>
module attributes {stable_mosaic.version = 11 : i64} {
  func.func @resconv1d_kernel(%arg0: i32, %arg1: i32, %arg2: memref<1x64x128xf32, #tpu.memory_space<vmem>>, %arg3: memref<1x1x8x128xf32, #tpu.memory_space<vmem>>, %arg4: memref<3x128x128xbf16, #tpu.memory_space<vmem>>, %arg5: memref<1x128xf32, #tpu.memory_space<vmem>>, %arg6: memref<128x128xbf16, #tpu.memory_space<vmem>>, %arg7: memref<1x128xf32, #tpu.memory_space<vmem>>, %arg8: memref<1x64x128xf32, #tpu.memory_space<vmem>>) attributes {dimension_semantics = [#tpu.dimension_semantics<parallel>, #tpu.dimension_semantics<parallel>], iteration_bounds = array<i64: 2, 3>, scalar_prefetch = 0 : i64, scratch_operands = 0 : i64, tpu.core_type = #tpu.core_type<tc>, window_params = [{transform_indices = @transform_0, window_bounds = array<i64: 1, 64, 128>}, {transform_indices = @transform_1, window_bounds = array<i64: 1, 1, 8, 128>}, {pipeline_mode = #tpu.pipeline_mode<synchronous>, transform_indices = @transform_2, window_bounds = array<i64: 3, 128, 128>}, {pipeline_mode = #tpu.pipeline_mode<synchronous>, transform_indices = @transform_3, window_bounds = array<i64: 1, 128>}, {pipeline_mode = #tpu.pipeline_mode<synchronous>, transform_indices = @transform_4, window_bounds = array<i64: 128, 128>}, {pipeline_mode = #tpu.pipeline_mode<synchronous>, transform_indices = @transform_5, window_bounds = array<i64: 1, 128>}, {transform_indices = @transform_6, window_bounds = array<i64: 1, 64, 128>}]} {
    %c0 = arith.constant 0 : index
    %c0_0 = arith.constant 0 : index
    %c0_1 = arith.constant 0 : index
    %0 = vector.load %arg2[%c0, %c0_0, %c0_1] : memref<1x64x128xf32, #tpu.memory_space<vmem>>, vector<1x64x128xf32>
    %1 = vector.shape_cast %0 : vector<1x64x128xf32> to vector<64x128xf32>
    %2 = arith.negf %1 : vector<64x128xf32>
    %3 = math.exp %2 : vector<64x128xf32>
    %cst = arith.constant 1.000000e+00 : f32
    %4 = vector.broadcast %cst : f32 to vector<64x128xf32>
    %5 = arith.addf %4, %3 : vector<64x128xf32>
    %6 = arith.divf %4, %5 : vector<64x128xf32>
    %7 = arith.mulf %1, %6 : vector<64x128xf32>
    %c0_2 = arith.constant 0 : index
    %c0_3 = arith.constant 0 : index
    %c0_4 = arith.constant 0 : index
    %c0_5 = arith.constant 0 : index
    %8 = vector.load %arg3[%c0_2, %c0_3, %c0_4, %c0_5] : memref<1x1x8x128xf32, #tpu.memory_space<vmem>>, vector<1x1x8x128xf32>
    %9 = vector.shape_cast %8 : vector<1x1x8x128xf32> to vector<8x128xf32>
    %10 = arith.negf %9 : vector<8x128xf32>
    %11 = math.exp %10 : vector<8x128xf32>
    %cst_6 = arith.constant 1.000000e+00 : f32
    %12 = vector.broadcast %cst_6 : f32 to vector<8x128xf32>
    %13 = arith.addf %12, %11 : vector<8x128xf32>
    %14 = arith.divf %12, %13 : vector<8x128xf32>
    %15 = arith.mulf %9, %14 : vector<8x128xf32>
    %16 = vector.extract_strided_slice %15 {offsets = [0, 0], sizes = [1, 128], strides = [1, 1]} : vector<8x128xf32> to vector<1x128xf32>
    %17 = vector.shape_cast %16 : vector<1x128xf32> to vector<1x128xf32>
    %18 = vector.broadcast %17 : vector<1x128xf32> to vector<64x128xf32>
    %19 = vector.extract_strided_slice %15 {offsets = [1, 0], sizes = [1, 128], strides = [1, 1]} : vector<8x128xf32> to vector<1x128xf32>
    %20 = vector.shape_cast %19 : vector<1x128xf32> to vector<1x128xf32>
    %21 = vector.broadcast %20 : vector<1x128xf32> to vector<64x128xf32>
    %22 = tpu.iota {dimensions = array<i32: 0>} : vector<64x128xi32>
    %c0_i32 = arith.constant 0 : i32
    %23 = vector.broadcast %c0_i32 : i32 to vector<64x128xi32>
    %24 = arith.cmpi eq, %22, %23 : vector<64x128xi32>
    %c1_i32 = arith.constant 1 : i32
    %25 = tpu.dynamic_rotate %7 by %c1_i32 dim 0 : vector<64x128xf32>, i32 -> vector<64x128xf32>
    %26 = arith.select %24, %18, %25 : vector<64x128xi1>, vector<64x128xf32>
    %c63_i32 = arith.constant 63 : i32
    %27 = vector.broadcast %c63_i32 : i32 to vector<64x128xi32>
    %28 = arith.cmpi eq, %22, %27 : vector<64x128xi32>
    %c63_i32_7 = arith.constant 63 : i32
    %29 = tpu.dynamic_rotate %7 by %c63_i32_7 dim 0 : vector<64x128xf32>, i32 -> vector<64x128xf32>
    %30 = arith.select %28, %21, %29 : vector<64x128xi1>, vector<64x128xf32>
    %31 = arith.truncf %26 : vector<64x128xf32> to vector<64x128xbf16>
    %c0_8 = arith.constant 0 : index
    %c0_9 = arith.constant 0 : index
    %c0_10 = arith.constant 0 : index
    %32 = vector.load %arg4[%c0_8, %c0_9, %c0_10] : memref<3x128x128xbf16, #tpu.memory_space<vmem>>, vector<1x128x128xbf16>
    %33 = vector.shape_cast %32 : vector<1x128x128xbf16> to vector<128x128xbf16>
    %cst_11 = arith.constant dense<0.000000e+00> : vector<64x128xf32>
    %34 = tpu.matmul %31, %33, %cst_11 {dimension_numbers = #tpu.dot_dimension_numbers<[1], [0], [0], [1], [0, 0, 1, 1], [], []>} : vector<64x128xbf16>, vector<128x128xbf16>, vector<64x128xf32> -> vector<64x128xf32>
    %35 = arith.truncf %7 : vector<64x128xf32> to vector<64x128xbf16>
    %c1 = arith.constant 1 : index
    %c0_12 = arith.constant 0 : index
    %c0_13 = arith.constant 0 : index
    %36 = vector.load %arg4[%c1, %c0_12, %c0_13] : memref<3x128x128xbf16, #tpu.memory_space<vmem>>, vector<1x128x128xbf16>
    %37 = vector.shape_cast %36 : vector<1x128x128xbf16> to vector<128x128xbf16>
    %cst_14 = arith.constant dense<0.000000e+00> : vector<64x128xf32>
    %38 = tpu.matmul %35, %37, %cst_14 {dimension_numbers = #tpu.dot_dimension_numbers<[1], [0], [0], [1], [0, 0, 1, 1], [], []>} : vector<64x128xbf16>, vector<128x128xbf16>, vector<64x128xf32> -> vector<64x128xf32>
    %39 = arith.addf %34, %38 : vector<64x128xf32>
    %40 = arith.truncf %30 : vector<64x128xf32> to vector<64x128xbf16>
    %c2 = arith.constant 2 : index
    %c0_15 = arith.constant 0 : index
    %c0_16 = arith.constant 0 : index
    %41 = vector.load %arg4[%c2, %c0_15, %c0_16] : memref<3x128x128xbf16, #tpu.memory_space<vmem>>, vector<1x128x128xbf16>
    %42 = vector.shape_cast %41 : vector<1x128x128xbf16> to vector<128x128xbf16>
    %cst_17 = arith.constant dense<0.000000e+00> : vector<64x128xf32>
    %43 = tpu.matmul %40, %42, %cst_17 {dimension_numbers = #tpu.dot_dimension_numbers<[1], [0], [0], [1], [0, 0, 1, 1], [], []>} : vector<64x128xbf16>, vector<128x128xbf16>, vector<64x128xf32> -> vector<64x128xf32>
    %44 = arith.addf %39, %43 : vector<64x128xf32>
    %c0_18 = arith.constant 0 : index
    %c0_19 = arith.constant 0 : index
    %45 = vector.load %arg5[%c0_18, %c0_19] : memref<1x128xf32, #tpu.memory_space<vmem>>, vector<1x128xf32>
    %46 = vector.broadcast %45 : vector<1x128xf32> to vector<64x128xf32>
    %47 = arith.addf %44, %46 : vector<64x128xf32>
    %48 = arith.negf %47 : vector<64x128xf32>
    %49 = math.exp %48 : vector<64x128xf32>
    %cst_20 = arith.constant 1.000000e+00 : f32
    %50 = vector.broadcast %cst_20 : f32 to vector<64x128xf32>
    %51 = arith.addf %50, %49 : vector<64x128xf32>
    %52 = arith.divf %50, %51 : vector<64x128xf32>
    %53 = arith.mulf %47, %52 : vector<64x128xf32>
    %54 = arith.truncf %53 : vector<64x128xf32> to vector<64x128xbf16>
    %c0_21 = arith.constant 0 : index
    %c0_22 = arith.constant 0 : index
    %55 = vector.load %arg6[%c0_21, %c0_22] : memref<128x128xbf16, #tpu.memory_space<vmem>>, vector<128x128xbf16>
    %cst_23 = arith.constant dense<0.000000e+00> : vector<64x128xf32>
    %56 = tpu.matmul %54, %55, %cst_23 {dimension_numbers = #tpu.dot_dimension_numbers<[1], [0], [0], [1], [0, 0, 1, 1], [], []>} : vector<64x128xbf16>, vector<128x128xbf16>, vector<64x128xf32> -> vector<64x128xf32>
    %c0_24 = arith.constant 0 : index
    %c0_25 = arith.constant 0 : index
    %57 = vector.load %arg7[%c0_24, %c0_25] : memref<1x128xf32, #tpu.memory_space<vmem>>, vector<1x128xf32>
    %58 = vector.broadcast %57 : vector<1x128xf32> to vector<64x128xf32>
    %59 = arith.addf %56, %58 : vector<64x128xf32>
    %60 = arith.addf %59, %1 : vector<64x128xf32>
    %c0_26 = arith.constant 0 : index
    %c0_27 = arith.constant 0 : index
    %c0_28 = arith.constant 0 : index
    %61 = vector.load %arg8[%c0_26, %c0_27, %c0_28] : memref<1x64x128xf32, #tpu.memory_space<vmem>>, vector<1x64x128xf32>
    %62 = vector.shape_cast %61 : vector<1x64x128xf32> to vector<64x128xf32>
    %63 = vector.shape_cast %60 : vector<64x128xf32> to vector<1x64x128xf32>
    tpu.vector_store %arg8[%c0_26, %c0_27, %c0_28], %63 {strides = array<i32>} : memref<1x64x128xf32, #tpu.memory_space<vmem>>, vector<1x64x128xf32>,
    return
  }
  func.func @transform_0(%arg0: i32, %arg1: i32) -> (i32, i32, i32) {
    %c0_i32 = arith.constant 0 : i32
    %c0_i32_0 = arith.constant 0 : i32
    return %arg0, %arg1, %c0_i32 : i32, i32, i32
  }
  func.func @transform_1(%arg0: i32, %arg1: i32) -> (i32, i32, i32, i32) {
    %c0_i32 = arith.constant 0 : i32
    %c0_i32_0 = arith.constant 0 : i32
    %c0_i32_1 = arith.constant 0 : i32
    return %arg0, %arg1, %c0_i32, %c0_i32_0 : i32, i32, i32, i32
  }
  func.func @transform_2(%arg0: i32, %arg1: i32) -> (i32, i32, i32) {
    %c0_i32 = arith.constant 0 : i32
    %c0_i32_0 = arith.constant 0 : i32
    %c0_i32_1 = arith.constant 0 : i32
    %c0_i32_2 = arith.constant 0 : i32
    return %c0_i32, %c0_i32_0, %c0_i32_1 : i32, i32, i32
  }
  func.func @transform_3(%arg0: i32, %arg1: i32) -> (i32, i32) {
    %c0_i32 = arith.constant 0 : i32
    %c0_i32_0 = arith.constant 0 : i32
    %c0_i32_1 = arith.constant 0 : i32
    return %c0_i32, %c0_i32_0 : i32, i32
  }
  func.func @transform_4(%arg0: i32, %arg1: i32) -> (i32, i32) {
    %c0_i32 = arith.constant 0 : i32
    %c0_i32_0 = arith.constant 0 : i32
    %c0_i32_1 = arith.constant 0 : i32
    return %c0_i32, %c0_i32_0 : i32, i32
  }
  func.func @transform_5(%arg0: i32, %arg1: i32) -> (i32, i32) {
    %c0_i32 = arith.constant 0 : i32
    %c0_i32_0 = arith.constant 0 : i32
    %c0_i32_1 = arith.constant 0 : i32
    return %c0_i32, %c0_i32_0 : i32, i32
  }
  func.func @transform_6(%arg0: i32, %arg1: i32) -> (i32, i32, i32) {
    %c0_i32 = arith.constant 0 : i32
    %c0_i32_0 = arith.constant 0 : i32
    return %arg0, %arg1, %c0_i32 : i32, i32, i32
  }
}

</mosaic_0001>

<llo_original>
// kernel: resconv1d_block.1
$region0: #{resconv1d_block.1}
  #allocation0 [shape = 'u32[]', space=smem, size = 0x4, offset = 0x4, fixed_abs, tag = 'smem constant byte address 0x4 - core index']
  #allocation1 [shape = 'u32[144,128]{1,0:T(1,128)}', space=vmem, size = 0x12000, scoped, tag = 'internal scratch']
  %s0 = inlined_call_operand.vmem [shape: f32[2,192,128], index: 0, kind: input, shape index: {}]
  %s1 = inlined_call_operand.vmem [shape: f32[2,3,8,128], index: 1, kind: input, shape index: {}]
  %s2 = inlined_call_operand.vmem [shape: bf16[3,128,128], index: 2, kind: input, shape index: {}]
  %s3 = inlined_call_operand.vmem [shape: f32[1,128], index: 3, kind: input, shape index: {}]
  %s4 = inlined_call_operand.vmem [shape: bf16[128,128], index: 4, kind: input, shape index: {}]
  %s5 = inlined_call_operand.vmem [shape: f32[1,128], index: 5, kind: input, shape index: {}]
  %s6 = inlined_call_operand.vmem [shape: f32[2,192,128], index: 6, kind: output, shape index: {}]
  %s7 = sld [smem:[#allocation0]]
  $region57: #{resconv1d_block.1} parent=0
    _
  %s9 = ssub.s32 1, %s7
  %s10 = scalar_select 0, %s9, %s7
  loop: start=0, step=1, limit=8
  $region2: #{resconv1d_block.1} parent=0 // loop_pre_header
    _
  $region3: #{resconv1d_block.1} parent=0 // loop_header
    %s12 = sphi 0, %s16
    %p13 = scmp.ge.s32.totalorder %s12, 8
    %s19 = sphi 0, %s31
    %s20 = sphi 0, %s27
    %s21 = sphi 0, %s19
    %s22 = sphi 0, %s20
    %s23 = sphi 0, %s21
    %s24 = sphi 0, %s22
    %s36 = sphi 0, %s38
    %s39 = sphi 0, %s36
    %s40 = sphi 0, %s39
    %s56 = sphi 0, %s40
    %s64 = sphi 0, %s66
    %s67 = sphi 0, %s64
    %s68 = sphi 0, %s67
    %s84 = sphi 0, %s68
    %s88 = sphi 0, %s88
    %s90 = sphi 0, %s88
    %s91 = sphi 0, %s90
    %s105 = sphi 0, %s91
    %s109 = sphi 0, %s109
    %s111 = sphi 0, %s109
    %s112 = sphi 0, %s111
    %s126 = sphi 0, %s112
    %s130 = sphi 0, %s130
    %s132 = sphi 0, %s130
    %s133 = sphi 0, %s132
    %s147 = sphi 0, %s133
    %s151 = sphi 0, %s151
    %s153 = sphi 0, %s151
    %s154 = sphi 0, %s153
    %s168 = sphi 0, %s154
    %s176 = sphi 0, %s178
    %s179 = sphi 0, %s176
    %s180 = sphi 0, %s179
    %s196 = sphi 0, %s180
  $region4: #{resconv1d_block.1} parent=0 // loop_header_branch
    %15 = sbr.rel (%p13) target = $region8
  $region5: #{resconv1d_block.1} parent=0 // loop_body
    %s17 = ssub.s32 %s12, 1
    %s18 = ssub.s32 %s12, 2
    %s25 = sadd.s32 1, %s20
    %p26 = scmp.ge.s32.totalorder %s25, 3
    %s27 = scalar_select %p26, 0, %s25
    %s28 = sadd.s32 1, %s19
    %s29 = scalar_select %p26, %s28, %s19
    %p30 = scmp.ge.s32.totalorder %s29, 2
    %s31 = scalar_select %p30, 0, %s29
    %s32 = ssub.s32 %s19, %s31
    %s33 = ssub.s32 %s20, %s27
    %s34 = sor.u32 %s32, %s33
    %p35 = scmp.eq.s32.totalorder %s34, 0
    %s37 = sadd.s32 %s36, 1
    %s38 = scalar_select %p35, %s36, %s37
    %p41 = pneg %p35
    %p42 = scmp.eq.s32.totalorder %s12, 5
    %p43 = por %p41, %p42
    %p44 = scmp.ne.s32.totalorder %s36, %s39
    %p45 = scmp.eq.s32.totalorder %s12, 0
    %p46 = por %p44, %p45
    %p47 = scmp.ne.s32.totalorder %s36, %s39
    %p48 = scmp.eq.s32.totalorder %s17, 5
    %p49 = por %p47, %p48
    %p50 = scmp.ne.s32.totalorder %s39, %s40
    %p51 = scmp.eq.s32.totalorder %s17, 0
    %p52 = por %p50, %p51
    %p53 = scmp.ne.s32.totalorder %s39, %s40
    %p54 = scmp.eq.s32.totalorder %s18, 5
    %p55 = por %p53, %p54
    %p57 = scmp.ne.s32.totalorder %s40, %s56
    %p58 = scmp.eq.s32.totalorder %s18, 0
    %p59 = por %p57, %p58
    %s60 = ssub.s32 %s19, %s31
    %s61 = ssub.s32 %s20, %s27
    %s62 = sor.u32 %s60, %s61
    %p63 = scmp.eq.s32.totalorder %s62, 0
    %s65 = sadd.s32 %s64, 1
    %s66 = scalar_select %p63, %s64, %s65
    %p69 = pneg %p63
    %p70 = scmp.eq.s32.totalorder %s12, 5
    %p71 = por %p69, %p70
    %p72 = scmp.ne.s32.totalorder %s64, %s67
    %p73 = scmp.eq.s32.totalorder %s12, 0
    %p74 = por %p72, %p73
    %p75 = scmp.ne.s32.totalorder %s64, %s67
    %p76 = scmp.eq.s32.totalorder %s17, 5
    %p77 = por %p75, %p76
    %p78 = scmp.ne.s32.totalorder %s67, %s68
    %p79 = scmp.eq.s32.totalorder %s17, 0
    %p80 = por %p78, %p79
    %p81 = scmp.ne.s32.totalorder %s67, %s68
    %p82 = scmp.eq.s32.totalorder %s18, 5
    %p83 = por %p81, %p82
    %p85 = scmp.ne.s32.totalorder %s68, %s84
    %p86 = scmp.eq.s32.totalorder %s18, 0
    %p87 = por %p85, %p86
    %s89 = sadd.s32 %s88, 1
    %p92 = scmp.eq.s32.totalorder %s12, 5
    %p93 = scmp.ne.s32.totalorder %s88, %s90
    %p94 = scmp.eq.s32.totalorder %s12, 0
    %p95 = por %p93, %p94
    %p96 = scmp.ne.s32.totalorder %s88, %s90
    %p97 = scmp.eq.s32.totalorder %s17, 5
    %p98 = por %p96, %p97
    %p99 = scmp.ne.s32.totalorder %s90, %s91
    %p100 = scmp.eq.s32.totalorder %s17, 0
    %p101 = por %p99, %p100
    %p102 = scmp.ne.s32.totalorder %s90, %s91
    %p103 = scmp.eq.s32.totalorder %s18, 5
    %p104 = por %p102, %p103
    %p106 = scmp.ne.s32.totalorder %s91, %s105
    %p107 = scmp.eq.s32.totalorder %s18, 0
    %p108 = por %p106, %p107
    %s110 = sadd.s32 %s109, 1
    %p113 = scmp.eq.s32.totalorder %s12, 5
    %p114 = scmp.ne.s32.totalorder %s109, %s111
    %p115 = scmp.eq.s32.totalorder %s12, 0
    %p116 = por %p114, %p115
    %p117 = scmp.ne.s32.totalorder %s109, %s111
    %p118 = scmp.eq.s32.totalorder %s17, 5
    %p119 = por %p117, %p118
    %p120 = scmp.ne.s32.totalorder %s111, %s112
    %p121 = scmp.eq.s32.totalorder %s17, 0
    %p122 = por %p120, %p121
    %p123 = scmp.ne.s32.totalorder %s111, %s112
    %p124 = scmp.eq.s32.totalorder %s18, 5
    %p125 = por %p123, %p124
    %p127 = scmp.ne.s32.totalorder %s112, %s126
    %p128 = scmp.eq.s32.totalorder %s18, 0
    %p129 = por %p127, %p128
    %s131 = sadd.s32 %s130, 1
    %p134 = scmp.eq.s32.totalorder %s12, 5
    %p135 = scmp.ne.s32.totalorder %s130, %s132
    %p136 = scmp.eq.s32.totalorder %s12, 0
    %p137 = por %p135, %p136
    %p138 = scmp.ne.s32.totalorder %s130, %s132
    %p139 = scmp.eq.s32.totalorder %s17, 5
    %p140 = por %p138, %p139
    %p141 = scmp.ne.s32.totalorder %s132, %s133
    %p142 = scmp.eq.s32.totalorder %s17, 0
    %p143 = por %p141, %p142
    %p144 = scmp.ne.s32.totalorder %s132, %s133
    %p145 = scmp.eq.s32.totalorder %s18, 5
    %p146 = por %p144, %p145
    %p148 = scmp.ne.s32.totalorder %s133, %s147
    %p149 = scmp.eq.s32.totalorder %s18, 0
    %p150 = por %p148, %p149
    %s152 = sadd.s32 %s151, 1
    %p155 = scmp.eq.s32.totalorder %s12, 5
    %p156 = scmp.ne.s32.totalorder %s151, %s153
    %p157 = scmp.eq.s32.totalorder %s12, 0
    %p158 = por %p156, %p157
    %p159 = scmp.ne.s32.totalorder %s151, %s153
    %p160 = scmp.eq.s32.totalorder %s17, 5
    %p161 = por %p159, %p160
    %p162 = scmp.ne.s32.totalorder %s153, %s154
    %p163 = scmp.eq.s32.totalorder %s17, 0
    %p164 = por %p162, %p163
    %p165 = scmp.ne.s32.totalorder %s153, %s154
    %p166 = scmp.eq.s32.totalorder %s18, 5
    %p167 = por %p165, %p166
    %p169 = scmp.ne.s32.totalorder %s154, %s168
    %p170 = scmp.eq.s32.totalorder %s18, 0
    %p171 = por %p169, %p170
    %s172 = ssub.s32 %s19, %s31
    %s173 = ssub.s32 %s20, %s27
    %s174 = sor.u32 %s172, %s173
    %p175 = scmp.eq.s32.totalorder %s174, 0
    %s177 = sadd.s32 %s176, 1
    %s178 = scalar_select %p175, %s176, %s177
    %p181 = pneg %p175
    %p182 = scmp.eq.s32.totalorder %s12, 5
    %p183 = por %p181, %p182
    %p184 = scmp.ne.s32.totalorder %s176, %s179
    %p185 = scmp.eq.s32.totalorder %s12, 0
    %p186 = por %p184, %p185
    %p187 = scmp.ne.s32.totalorder %s176, %s179
    %p188 = scmp.eq.s32.totalorder %s17, 5
    %p189 = por %p187, %p188
    %p190 = scmp.ne.s32.totalorder %s179, %s180
    %p191 = scmp.eq.s32.totalorder %s17, 0
    %p192 = por %p190, %p191
    %p193 = scmp.ne.s32.totalorder %s179, %s180
    %p194 = scmp.eq.s32.totalorder %s18, 5
    %p195 = por %p193, %p194
    %p197 = scmp.ne.s32.totalorder %s180, %s196
    %p198 = scmp.eq.s32.totalorder %s18, 0
    %p199 = por %p197, %p198
    %p200 = scmp.le.s32.totalorder 1, %s12
    %p201 = scmp.lt.s32.totalorder %s12, 7
    %p202 = pnand %p200, %p201
    %p203 = pneg %p202
    // Predicated region
    $region9: #{resconv1d_block.1} parent=5 // pred_check
      _
    $region10: #{resconv1d_block.1} parent=5 // pred_check_branch
      %205 = sbr.rel (%p202) target = $region12
    $region11: #{resconv1d_block.1} parent=5 // pred_region
      %s206 = ssub.s32 %s12, 1
      // Predicated region
      $region13: #{resconv1d_block.1} parent=11 // pred_check
        %p207 = pneg %p101
      $region14: #{resconv1d_block.1} parent=11 // pred_check_branch
        %209 = sbr.rel (%p207) target = $region16
      $region15: #{resconv1d_block.1} parent=11 // pred_region
        _
      $region16: #{resconv1d_block.1} parent=11 // pred_fallthru
        _
      // Predicated region
      $region17: #{resconv1d_block.1} parent=11 // pred_check
        %p210 = pneg %p122
      $region18: #{resconv1d_block.1} parent=11 // pred_check_branch
        %212 = sbr.rel (%p210) target = $region20
      $region19: #{resconv1d_block.1} parent=11 // pred_region
        _
      $region20: #{resconv1d_block.1} parent=11 // pred_fallthru
        _
      // Predicated region
      $region21: #{resconv1d_block.1} parent=11 // pred_check
        %p213 = pneg %p143
      $region22: #{resconv1d_block.1} parent=11 // pred_check_branch
        %215 = sbr.rel (%p213) target = $region24
      $region23: #{resconv1d_block.1} parent=11 // pred_region
        _
      $region24: #{resconv1d_block.1} parent=11 // pred_fallthru
        _
      // Predicated region
      $region25: #{resconv1d_block.1} parent=11 // pred_check
        %p216 = pneg %p164
      $region26: #{resconv1d_block.1} parent=11 // pred_check_branch
        %218 = sbr.rel (%p216) target = $region28
      $region27: #{resconv1d_block.1} parent=11 // pred_region
        _
      $region28: #{resconv1d_block.1} parent=11 // pred_fallthru
        _
    $region12: #{resconv1d_block.1} parent=5 // pred_fallthru
      _
    %p219 = scmp.lt.s32.totalorder %s12, 6
    // Predicated region
    $region29: #{resconv1d_block.1} parent=5 // pred_check
      %p220 = pneg %p219
    $region30: #{resconv1d_block.1} parent=5 // pred_check_branch
      %222 = sbr.rel (%p220) target = $region32
    $region31: #{resconv1d_block.1} parent=5 // pred_region
      // Predicated region
      $region33: #{resconv1d_block.1} parent=31 // pred_check
        %p223 = pneg %p46
      $region34: #{resconv1d_block.1} parent=31 // pred_check_branch
        %225 = sbr.rel (%p223) target = $region36
      $region35: #{resconv1d_block.1} parent=31 // pred_region
        %s226 = smul.u32 8, %s20
        %p227 = scmp.lt.s32.totalorder %s19, 1
        %s228 = scalar_select %p227, %s19, 1
        %p229 = scmp.lt.s32.totalorder %s226, 23
        %s230 = scalar_select %p229, %s226, 23
        %s231 = smul.addr %s228, 24
        %s232 = sadd.s32 %s230, %s231
        %s233 = smul.addr %s232, 8
        %s234 = scalar_lea.vmem %s0, %s233
        %s235 = smul.u32 8, %s20
      $region36: #{resconv1d_block.1} parent=31 // pred_fallthru
        _
      // Predicated region
      $region37: #{resconv1d_block.1} parent=31 // pred_check
        %p236 = pneg %p74
      $region38: #{resconv1d_block.1} parent=31 // pred_check_branch
        %238 = sbr.rel (%p236) target = $region40
      $region39: #{resconv1d_block.1} parent=31 // pred_region
        %p239 = scmp.lt.s32.totalorder %s19, 1
        %s240 = scalar_select %p239, %s19, 1
        %p241 = scmp.lt.s32.totalorder %s20, 2
        %s242 = scalar_select %p241, %s20, 2
        %s243 = smul.addr %s240, 3
        %s244 = sadd.s32 %s242, %s243
        %s245 = smul.addr %s244, 8
        %s246 = scalar_lea.vmem %s1, %s245
      $region40: #{resconv1d_block.1} parent=31 // pred_fallthru
        _
    $region32: #{resconv1d_block.1} parent=5 // pred_fallthru
      _
    %p247 = scmp.le.s32.totalorder 1, %s12
    %p248 = scmp.lt.s32.totalorder %s12, 7
    %p249 = pnand %p247, %p248
    %p250 = pneg %p249
    // Predicated region
    $region41: #{resconv1d_block.1} parent=5 // pred_check
      _
    $region42: #{resconv1d_block.1} parent=5 // pred_check_branch
      %252 = sbr.rel (%p249) target = $region44
    $region43: #{resconv1d_block.1} parent=5 // pred_region
      %s253 = ssub.s32 %s12, 1
      %s254 = smul.u32 8, %s22
      %p255 = scmp.lt.s32.totalorder %s21, 1
      %s256 = scalar_select %p255, %s21, 1
      %p257 = scmp.lt.s32.totalorder %s254, 23
      %s258 = scalar_select %p257, %s254, 23
      %s259 = smul.addr %s256, 24
      %s260 = sadd.s32 %s258, %s259
      %s261 = smul.addr %s260, 8
      %s262 = scalar_lea.vmem %s0, %s261
      %p263 = pneg %p52
      %p264 = pneg %p49
      %p265 = scmp.lt.s32.totalorder %s21, 1
      %s266 = scalar_select %p265, %s21, 1
      %p267 = scmp.lt.s32.totalorder %s22, 2
      %s268 = scalar_select %p267, %s22, 2
      %s269 = smul.addr %s266, 3
      %s270 = sadd.s32 %s268, %s269
      %s271 = smul.addr %s270, 8
      %s272 = scalar_lea.vmem %s1, %s271
      %p273 = pneg %p80
      %p274 = pneg %p77
      %p275 = pneg %p101
      %p276 = pneg %p98
      %p277 = pneg %p122
      %p278 = pneg %p119
      %p279 = pneg %p143
      %p280 = pneg %p140
      %p281 = pneg %p164
      %p282 = pneg %p161
      %p283 = pneg %p192
      %p284 = pneg %p189
      %s285 = smul.u32 8, %s22
      %p286 = scmp.lt.s32.totalorder %s21, 1
      %s287 = scalar_select %p286, %s21, 1
      %p288 = scmp.lt.s32.totalorder %s285, 23
      %s289 = scalar_select %p288, %s285, 23
      %s290 = smul.addr %s287, 24
      %s291 = sadd.s32 %s289, %s290
      %s292 = smul.addr %s291, 8
      %s293 = scalar_lea.vmem %s6, %s292
      %s294 = smul.u32 8, %s22
      %p295 = scmp.lt.s32.totalorder %s21, 1
      %s296 = scalar_select %p295, %s21, 1
      %p297 = scmp.lt.s32.totalorder %s294, 23
      %s298 = scalar_select %p297, %s294, 23
      %s299 = smul.addr %s296, 24
      %s300 = sadd.s32 %s298, %s299
      %s301 = smul.addr %s300, 8
      %s302 = scalar_lea.vmem %s0, %s301
      %s303 = smul.u32 8, %s22
      %p304 = scmp.lt.s32.totalorder %s21, 1
      %s305 = scalar_select %p304, %s21, 1
      %p306 = scmp.lt.s32.totalorder %s22, 2
      %s307 = scalar_select %p306, %s22, 2
      %s308 = smul.addr %s305, 3
      %s309 = sadd.s32 %s307, %s308
      %s310 = smul.addr %s309, 8
      %s311 = scalar_lea.vmem %s1, %s310
      %s312 = smul.u32 8, %s22
      %p313 = scmp.lt.s32.totalorder %s21, 1
      %s314 = scalar_select %p313, %s21, 1
      %p315 = scmp.lt.s32.totalorder %s312, 23
      %s316 = scalar_select %p315, %s312, 23
      %s317 = smul.addr %s314, 24
      %s318 = sadd.s32 %s316, %s317
      %s319 = smul.addr %s318, 8
      %s320 = scalar_lea.vmem %s6, %s319
      %s321 = smul.u32 8, %s22
      %v323 = vld [vmem:[%s302] sm:$0xff]
      %v324 = vld [vmem:[%s302 + $0x8] sm:$0xff]
      %v325 = vld [vmem:[%s302 + $0x10] sm:$0xff]
      %v326 = vld [vmem:[%s302 + $0x18] sm:$0xff]
      %v327 = vld [vmem:[%s302 + $0x20] sm:$0xff]
      %v328 = vld [vmem:[%s302 + $0x28] sm:$0xff]
      %v329 = vld [vmem:[%s302 + $0x30] sm:$0xff]
      %v330 = vld [vmem:[%s302 + $0x38] sm:$0xff]
      %v331 = vxor.u32 %v323, 2147483648
      %v332 = vxor.u32 %v324, 2147483648
      %v333 = vxor.u32 %v325, 2147483648
      %v334 = vxor.u32 %v326, 2147483648
      %v335 = vxor.u32 %v327, 2147483648
      %v336 = vxor.u32 %v328, 2147483648
      %v337 = vxor.u32 %v329, 2147483648
      %v338 = vxor.u32 %v330, 2147483648
      %v339 = vmul.f32 %v331, 1.442695
      %v340 = vpow.pop %v339
      %v341 = vmul.f32 %v332, 1.442695
      %v342 = vpow.pop %v341
      %v343 = vmul.f32 %v333, 1.442695
      %v344 = vpow.pop %v343
      %v345 = vmul.f32 %v334, 1.442695
      %v346 = vpow.pop %v345
      %v347 = vmul.f32 %v335, 1.442695
      %v348 = vpow.pop %v347
      %v349 = vmul.f32 %v336, 1.442695
      %v350 = vpow.pop %v349
      %v351 = vmul.f32 %v337, 1.442695
      %v352 = vpow.pop %v351
      %v353 = vmul.f32 %v338, 1.442695
      %v354 = vpow.pop %v353
      %v355 = vadd.f32 %v340, 1.0
      %v356 = vadd.f32 %v342, 1.0
      %v357 = vadd.f32 %v344, 1.0
      %v358 = vadd.f32 %v346, 1.0
      %v359 = vadd.f32 %v348, 1.0
      %v360 = vadd.f32 %v350, 1.0
      %v361 = vadd.f32 %v352, 1.0
      %v362 = vadd.f32 %v354, 1.0
      %v363 = vrcp.pop %v355
      %v364 = vmul.f32 1.0, %v363
      %v365 = vrcp.pop %v356
      %v366 = vmul.f32 1.0, %v365
      %v367 = vrcp.pop %v357
      %v368 = vmul.f32 1.0, %v367
      %v369 = vrcp.pop %v358
      %v370 = vmul.f32 1.0, %v369
      %v371 = vrcp.pop %v359
      %v372 = vmul.f32 1.0, %v371
      %v373 = vrcp.pop %v360
      %v374 = vmul.f32 1.0, %v373
      %v375 = vrcp.pop %v361
      %v376 = vmul.f32 1.0, %v375
      %v377 = vrcp.pop %v362
      %v378 = vmul.f32 1.0, %v377
      %v379 = vmul.f32 %v323, %v364
      %v380 = vmul.f32 %v324, %v366
      %v381 = vmul.f32 %v325, %v368
      %v382 = vmul.f32 %v326, %v370
      %v383 = vmul.f32 %v327, %v372
      %v384 = vmul.f32 %v328, %v374
      %v385 = vmul.f32 %v329, %v376
      %v386 = vmul.f32 %v330, %v378
      %v387 = vld [vmem:[%s311] sm:$0xff]
      %v388 = vxor.u32 %v387, 2147483648
      %v389 = vmul.f32 %v388, 1.442695
      %v390 = vpow.pop %v389
      %v391 = vadd.f32 %v390, 1.0
      %v392 = vrcp.pop %v391
      %v393 = vmul.f32 1.0, %v392
      %v394 = vmul.f32 %v387, %v393
      %v395 = vlaneseq
      %v396 = vshrl.u32 %v395, 7
      %v397 = vsub.s32 0, %v396
      %v398 = vrot.slane %v394, %v397
      %v399 = vlaneseq
      %v400 = vshrl.u32 %v399, 7
      %v401 = vsub.s32 1, %v400
      %v402 = vrot.slane %v394, %v401
      %v403 = vlaneseq
      %v404 = vshrl.u32 %v403, 7
      %v405 = vadd.s32 %v404, 8
      %v406 = vadd.s32 %v404, 16
      %v407 = vadd.s32 %v404, 24
      %v408 = vadd.s32 %v404, 32
      %v409 = vadd.s32 %v404, 40
      %v410 = vadd.s32 %v404, 48
      %v411 = vadd.s32 %v404, 56
      %vm412 = vcmp.eq.s32.totalorder %v404, 0
      %vm413 = vcmp.eq.s32.totalorder %v405, 0
      %vm414 = vcmp.eq.s32.totalorder %v406, 0
      %vm415 = vcmp.eq.s32.totalorder %v407, 0
      %vm416 = vcmp.eq.s32.totalorder %v408, 0
      %vm417 = vcmp.eq.s32.totalorder %v409, 0
      %vm418 = vcmp.eq.s32.totalorder %v410, 0
      %vm419 = vcmp.eq.s32.totalorder %v411, 0
      %v420 = vrot.slane %v379, 7
      %v421 = vrot.slane %v380, 7
      %v422 = vrot.slane %v381, 7
      %v423 = vrot.slane %v382, 7
      %v424 = vrot.slane %v383, 7
      %v425 = vrot.slane %v384, 7
      %v426 = vrot.slane %v385, 7
      %v427 = vrot.slane %v386, 7
      %vm428 = vcmp.lt.s32.totalorder %v404, 1
      %v429 = vsel %vm428, %v426, %v427
      %v430 = vsel %vm428, %v425, %v426
      %v431 = vsel %vm428, %v424, %v425
      %v432 = vsel %vm428, %v423, %v424
      %v433 = vsel %vm428, %v422, %v423
      %v434 = vsel %vm428, %v421, %v422
      %v435 = vsel %vm428, %v420, %v421
      %v436 = vsel %vm428, %v427, %v420
      %v437 = vsel %vm412, %v398, %v436
      %v438 = vsel %vm413, %v398, %v435
      %v439 = vsel %vm414, %v398, %v434
      %v440 = vsel %vm415, %v398, %v433
      %v441 = vsel %vm416, %v398, %v432
      %v442 = vsel %vm417, %v398, %v431
      %v443 = vsel %vm418, %v398, %v430
      %v444 = vsel %vm419, %v398, %v429
      %vm445 = vcmp.eq.s32.totalorder %v404, 63
      %vm446 = vcmp.eq.s32.totalorder %v405, 63
      %vm447 = vcmp.eq.s32.totalorder %v406, 63
      %vm448 = vcmp.eq.s32.totalorder %v407, 63
      %vm449 = vcmp.eq.s32.totalorder %v408, 63
      %vm450 = vcmp.eq.s32.totalorder %v409, 63
      %vm451 = vcmp.eq.s32.totalorder %v410, 63
      %vm452 = vcmp.eq.s32.totalorder %v411, 63
      %v453 = vrot.slane %v379, 1
      %v454 = vrot.slane %v380, 1
      %v455 = vrot.slane %v381, 1
      %v456 = vrot.slane %v382, 1
      %v457 = vrot.slane %v383, 1
      %v458 = vrot.slane %v384, 1
      %v459 = vrot.slane %v385, 1
      %v460 = vrot.slane %v386, 1
      %vm461 = vcmp.lt.s32.totalorder %v404, 7
      %v462 = vsel %vm461, %v459, %v460
      %v463 = vsel %vm461, %v458, %v459
      %v464 = vsel %vm461, %v457, %v458
      %v465 = vsel %vm461, %v456, %v457
      %v466 = vsel %vm461, %v455, %v456
      %v467 = vsel %vm461, %v454, %v455
      %v468 = vsel %vm461, %v453, %v454
      %v469 = vsel %vm461, %v460, %v453
      %v470 = vsel %vm445, %v402, %v468
      %v471 = vsel %vm446, %v402, %v467
      %v472 = vsel %vm447, %v402, %v466
      %v473 = vsel %vm448, %v402, %v465
      %v474 = vsel %vm449, %v402, %v464
      %v475 = vsel %vm450, %v402, %v463
      %v476 = vsel %vm451, %v402, %v462
      %v477 = vsel %vm452, %v402, %v469
      %v478 = vpack.c.bf16 %v438, %v437
      %v479 = vpack.c.bf16 %v440, %v439
      %v480 = vpack.c.bf16 %v442, %v441
      %v481 = vpack.c.bf16 %v444, %v443
      %v482 = vld [vmem:[%s2] sm:$0xf]
      %v483 = vld [vmem:[%s2 + $0x4] sm:$0xf]
      %v484 = vld [vmem:[%s2 + $0x8] sm:$0xf]
      %v485 = vld [vmem:[%s2 + $0xc] sm:$0xf]
      %v486 = vld [vmem:[%s2 + $0x10] sm:$0xf]
      %v487 = vld [vmem:[%s2 + $0x14] sm:$0xf]
      %v488 = vld [vmem:[%s2 + $0x18] sm:$0xf]
      %v489 = vld [vmem:[%s2 + $0x1c] sm:$0xf]
      %v490 = vld [vmem:[%s2 + $0x20] sm:$0xf]
      %v491 = vld [vmem:[%s2 + $0x24] sm:$0xf]
      %v492 = vld [vmem:[%s2 + $0x28] sm:$0xf]
      %v493 = vld [vmem:[%s2 + $0x2c] sm:$0xf]
      %v494 = vld [vmem:[%s2 + $0x30] sm:$0xf]
      %v495 = vld [vmem:[%s2 + $0x34] sm:$0xf]
      %v496 = vld [vmem:[%s2 + $0x38] sm:$0xf]
      %v497 = vld [vmem:[%s2 + $0x3c] sm:$0xf]
      %v498 = vpack.c.bf16 %v380, %v379
      %v499 = vpack.c.bf16 %v382, %v381
      %v500 = vpack.c.bf16 %v384, %v383
      %v501 = vpack.c.bf16 %v386, %v385
      %s502 = scalar_lea.vmem %s2, 64
      %v503 = vld [vmem:[%s502] sm:$0xf]
      %v504 = vld [vmem:[%s502 + $0x4] sm:$0xf]
      %v505 = vld [vmem:[%s502 + $0x8] sm:$0xf]
      %v506 = vld [vmem:[%s502 + $0xc] sm:$0xf]
      %v507 = vld [vmem:[%s502 + $0x10] sm:$0xf]
      %v508 = vld [vmem:[%s502 + $0x14] sm:$0xf]
      %v509 = vld [vmem:[%s502 + $0x18] sm:$0xf]
      %v510 = vld [vmem:[%s502 + $0x1c] sm:$0xf]
      %v511 = vld [vmem:[%s502 + $0x20] sm:$0xf]
      %v512 = vld [vmem:[%s502 + $0x24] sm:$0xf]
      %v513 = vld [vmem:[%s502 + $0x28] sm:$0xf]
      %v514 = vld [vmem:[%s502 + $0x2c] sm:$0xf]
      %v515 = vld [vmem:[%s502 + $0x30] sm:$0xf]
      %v516 = vld [vmem:[%s502 + $0x34] sm:$0xf]
      %v517 = vld [vmem:[%s502 + $0x38] sm:$0xf]
      %v518 = vld [vmem:[%s502 + $0x3c] sm:$0xf]
      %v535 = vunpack.c.l.b16 %v503
      %v536 = vunpack.c.l.b16 %v504
      %v537 = vunpack.c.l.b16 %v505
      %v538 = vunpack.c.l.b16 %v506
      %v539 = vunpack.c.l.b16 %v507
      %v540 = vunpack.c.l.b16 %v508
      %v541 = vunpack.c.l.b16 %v509
      %v542 = vunpack.c.l.b16 %v510
      %v543 = vunpack.c.l.b16 %v511
      %v544 = vunpack.c.l.b16 %v512
      %v545 = vunpack.c.l.b16 %v513
      %v546 = vunpack.c.l.b16 %v514
      %v547 = vunpack.c.l.b16 %v515
      %v548 = vunpack.c.l.b16 %v516
      %v549 = vunpack.c.l.b16 %v517
      %v550 = vunpack.c.l.b16 %v518
      %v551 = vpack.c.b16 %v536, %v535
      %v552 = vpack.c.b16 %v538, %v537
      %v553 = vpack.c.b16 %v540, %v539
      %v554 = vpack.c.b16 %v542, %v541
      %v555 = vpack.c.b16 %v544, %v543
      %v556 = vpack.c.b16 %v546, %v545
      %v557 = vpack.c.b16 %v548, %v547
      %v558 = vpack.c.b16 %v550, %v549
      %567 = vmatprep.subr.bf16.mxu0 0
      %568 = vmatpush1.bf16.msra.mxu0 %v558
      %569 = vmatprep.subr.bf16.mxu0 0
      %570 = vmatpush1.bf16.msra.mxu0 %v557
      %571 = vmatprep.subr.bf16.mxu0 0
      %572 = vmatpush1.bf16.msra.mxu0 %v556
      %573 = vmatprep.subr.bf16.mxu0 0
      %574 = vmatpush1.bf16.msra.mxu0 %v555
      %575 = vmatprep.subr.bf16.mxu0 0
      %576 = vmatpush1.bf16.msra.mxu0 %v554
      %577 = vmatprep.subr.bf16.mxu0 0
      %578 = vmatpush1.bf16.msra.mxu0 %v553
      %579 = vmatprep.subr.bf16.mxu0 0
      %580 = vmatpush1.bf16.msra.mxu0 %v552
      %581 = vmatprep.subr.bf16.mxu0 0
      %582 = vmatpush1.bf16.msra.mxu0 %v551
      %583 = vmatprep.subr.bf16.mxu0 0
      %584 = vmatpush2.bf16.msra.mxu0 0
      %585 = vmatprep.subr.bf16.mxu0 0
      %586 = vmatpush2.bf16.msra.mxu0 0
      %587 = vmatprep.subr.bf16.mxu0 0
      %588 = vmatpush2.bf16.msra.mxu0 0
      %589 = vmatprep.subr.bf16.mxu0 0
      %590 = vmatpush2.bf16.msra.mxu0 0
      %591 = vmatprep.subr.bf16.mxu0 0
      %592 = vmatpush2.bf16.msra.mxu0 0
      %593 = vmatprep.subr.bf16.mxu0 0
      %594 = vmatpush2.bf16.msra.mxu0 0
      %595 = vmatprep.subr.bf16.mxu0 0
      %596 = vmatpush2.bf16.msra.mxu0 0
      %597 = vmatprep.subr.bf16.mxu0 0
      %598 = vmatpush2.bf16.msra.mxu0 0
      %599 = vmatprep.mubr.bf16.mxu0 0
      %600 = vmatmul.mubr.bf16.gmra.mxu0 %v498
      %v601 = vpop.f32.mrf.mxu0
      %v602 = vadd.f32 0.0, %v601
      %v603 = vpop.f32.mrf.mxu0
      %v604 = vpop.f32.mrf.mxu0
      %v605 = vadd.f32 0.0, %v604
      %v606 = vpop.f32.mrf.mxu0
      %607 = vmatprep.mubr.bf16.mxu0 0
      %608 = vmatmul.mubr.bf16.gmra.mxu0 %v499
      %v609 = vpop.f32.mrf.mxu0
      %v610 = vadd.f32 0.0, %v609
      %v611 = vpop.f32.mrf.mxu0
      %v612 = vpop.f32.mrf.mxu0
      %v613 = vadd.f32 0.0, %v612
      %v614 = vpop.f32.mrf.mxu0
      %615 = vmatprep.mubr.bf16.mxu0 0
      %616 = vmatmul.mubr.bf16.gmra.mxu0 %v500
      %v617 = vpop.f32.mrf.mxu0
      %v618 = vadd.f32 0.0, %v617
      %v619 = vpop.f32.mrf.mxu0
      %v620 = vpop.f32.mrf.mxu0
      %v621 = vadd.f32 0.0, %v620
      %v622 = vpop.f32.mrf.mxu0
      %623 = vmatprep.mubr.bf16.mxu0 0
      %624 = vmatmul.mubr.bf16.gmra.mxu0 %v501
      %v625 = vpop.f32.mrf.mxu0
      %v626 = vadd.f32 0.0, %v625
      %v627 = vpop.f32.mrf.mxu0
      %v628 = vpop.f32.mrf.mxu0
      %v629 = vadd.f32 0.0, %v628
      %v630 = vpop.f32.mrf.mxu0
      %631 = vdwg.mxu0
      %v648 = vunpack.c.l.b16 %v482
      %v649 = vunpack.c.l.b16 %v483
      %v650 = vunpack.c.l.b16 %v484
      %v651 = vunpack.c.l.b16 %v485
      %v652 = vunpack.c.l.b16 %v486
      %v653 = vunpack.c.l.b16 %v487
      %v654 = vunpack.c.l.b16 %v488
      %v655 = vunpack.c.l.b16 %v489
      %v656 = vunpack.c.l.b16 %v490
      %v657 = vunpack.c.l.b16 %v491
      %v658 = vunpack.c.l.b16 %v492
      %v659 = vunpack.c.l.b16 %v493
      %v660 = vunpack.c.l.b16 %v494
      %v661 = vunpack.c.l.b16 %v495
      %v662 = vunpack.c.l.b16 %v496
      %v663 = vunpack.c.l.b16 %v497
      %v664 = vpack.c.b16 %v649, %v648
      %v665 = vpack.c.b16 %v651, %v650
      %v666 = vpack.c.b16 %v653, %v652
      %v667 = vpack.c.b16 %v655, %v654
      %v668 = vpack.c.b16 %v657, %v656
      %v669 = vpack.c.b16 %v659, %v658
      %v670 = vpack.c.b16 %v661, %v660
      %v671 = vpack.c.b16 %v663, %v662
      %680 = vmatprep.subr.bf16.mxu0 0
      %681 = vmatpush1.bf16.msra.mxu0 %v671
      %682 = vmatprep.subr.bf16.mxu0 0
      %683 = vmatpush1.bf16.msra.mxu0 %v670
      %684 = vmatprep.subr.bf16.mxu0 0
      %685 = vmatpush1.bf16.msra.mxu0 %v669
      %686 = vmatprep.subr.bf16.mxu0 0
      %687 = vmatpush1.bf16.msra.mxu0 %v668
      %688 = vmatprep.subr.bf16.mxu0 0
      %689 = vmatpush1.bf16.msra.mxu0 %v667
      %690 = vmatprep.subr.bf16.mxu0 0
      %691 = vmatpush1.bf16.msra.mxu0 %v666
      %692 = vmatprep.subr.bf16.mxu0 0
      %693 = vmatpush1.bf16.msra.mxu0 %v665
      %694 = vmatprep.subr.bf16.mxu0 0
      %695 = vmatpush1.bf16.msra.mxu0 %v664
      %696 = vmatprep.subr.bf16.mxu0 0
      %697 = vmatpush2.bf16.msra.mxu0 0
      %698 = vmatprep.subr.bf16.mxu0 0
      %699 = vmatpush2.bf16.msra.mxu0 0
      %700 = vmatprep.subr.bf16.mxu0 0
      %701 = vmatpush2.bf16.msra.mxu0 0
      %702 = vmatprep.subr.bf16.mxu0 0
      %703 = vmatpush2.bf16.msra.mxu0 0
      %704 = vmatprep.subr.bf16.mxu0 0
      %705 = vmatpush2.bf16.msra.mxu0 0
      %706 = vmatprep.subr.bf16.mxu0 0
      %707 = vmatpush2.bf16.msra.mxu0 0
      %708 = vmatprep.subr.bf16.mxu0 0
      %709 = vmatpush2.bf16.msra.mxu0 0
      %710 = vmatprep.subr.bf16.mxu0 0
      %711 = vmatpush2.bf16.msra.mxu0 0
      %712 = vmatprep.mubr.bf16.mxu0 0
      %713 = vmatmul.mubr.bf16.gmra.mxu0 %v478
      %v714 = vpop.f32.mrf.mxu0
      %v715 = vadd.f32 %v602, %v714
      %v716 = vpop.f32.mrf.mxu0
      %v717 = vpop.f32.mrf.mxu0
      %v718 = vadd.f32 %v605, %v717
      %v719 = vpop.f32.mrf.mxu0
      %720 = vmatprep.mubr.bf16.mxu0 0
      %721 = vmatmul.mubr.bf16.gmra.mxu0 %v479
      %v722 = vpop.f32.mrf.mxu0
      %v723 = vadd.f32 %v610, %v722
      %v724 = vpop.f32.mrf.mxu0
      %v725 = vpop.f32.mrf.mxu0
      %v726 = vadd.f32 %v613, %v725
      %v727 = vpop.f32.mrf.mxu0
      %728 = vmatprep.mubr.bf16.mxu0 0
      %729 = vmatmul.mubr.bf16.gmra.mxu0 %v480
      %v730 = vpop.f32.mrf.mxu0
      %v731 = vadd.f32 %v618, %v730
      %v732 = vpop.f32.mrf.mxu0
      %v733 = vpop.f32.mrf.mxu0
      %v734 = vadd.f32 %v621, %v733
      %v735 = vpop.f32.mrf.mxu0
      %736 = vmatprep.mubr.bf16.mxu0 0
      %737 = vmatmul.mubr.bf16.gmra.mxu0 %v481
      %v738 = vpop.f32.mrf.mxu0
      %v739 = vadd.f32 %v626, %v738
      %v740 = vpop.f32.mrf.mxu0
      %v741 = vpop.f32.mrf.mxu0
      %v742 = vadd.f32 %v629, %v741
      %v743 = vpop.f32.mrf.mxu0
      %744 = vdwg.mxu0
      %v745 = vpack.c.bf16 %v471, %v470
      %v746 = vpack.c.bf16 %v473, %v472
      %v747 = vpack.c.bf16 %v475, %v474
      %v748 = vpack.c.bf16 %v477, %v476
      %s749 = scalar_lea.vmem %s2, 128
      %v750 = vld [vmem:[%s749] sm:$0xf]
      %v751 = vld [vmem:[%s749 + $0x4] sm:$0xf]
      %v752 = vld [vmem:[%s749 + $0x8] sm:$0xf]
      %v753 = vld [vmem:[%s749 + $0xc] sm:$0xf]
      %v754 = vld [vmem:[%s749 + $0x10] sm:$0xf]
      %v755 = vld [vmem:[%s749 + $0x14] sm:$0xf]
      %v756 = vld [vmem:[%s749 + $0x18] sm:$0xf]
      %v757 = vld [vmem:[%s749 + $0x1c] sm:$0xf]
      %v758 = vld [vmem:[%s749 + $0x20] sm:$0xf]
      %v759 = vld [vmem:[%s749 + $0x24] sm:$0xf]
      %v760 = vld [vmem:[%s749 + $0x28] sm:$0xf]
      %v761 = vld [vmem:[%s749 + $0x2c] sm:$0xf]
      %v762 = vld [vmem:[%s749 + $0x30] sm:$0xf]
      %v763 = vld [vmem:[%s749 + $0x34] sm:$0xf]
      %v764 = vld [vmem:[%s749 + $0x38] sm:$0xf]
      %v765 = vld [vmem:[%s749 + $0x3c] sm:$0xf]
      %v782 = vunpack.c.l.b16 %v750
      %v783 = vunpack.c.l.b16 %v751
      %v784 = vunpack.c.l.b16 %v752
      %v785 = vunpack.c.l.b16 %v753
      %v786 = vunpack.c.l.b16 %v754
      %v787 = vunpack.c.l.b16 %v755
      %v788 = vunpack.c.l.b16 %v756
      %v789 = vunpack.c.l.b16 %v757
      %v790 = vunpack.c.l.b16 %v758
      %v791 = vunpack.c.l.b16 %v759
      %v792 = vunpack.c.l.b16 %v760
      %v793 = vunpack.c.l.b16 %v761
      %v794 = vunpack.c.l.b16 %v762
      %v795 = vunpack.c.l.b16 %v763
      %v796 = vunpack.c.l.b16 %v764
      %v797 = vunpack.c.l.b16 %v765
      %v798 = vpack.c.b16 %v783, %v782
      %v799 = vpack.c.b16 %v785, %v784
      %v800 = vpack.c.b16 %v787, %v786
      %v801 = vpack.c.b16 %v789, %v788
      %v802 = vpack.c.b16 %v791, %v790
      %v803 = vpack.c.b16 %v793, %v792
      %v804 = vpack.c.b16 %v795, %v794
      %v805 = vpack.c.b16 %v797, %v796
      %814 = vmatprep.subr.bf16.mxu0 0
      %815 = vmatpush1.bf16.msra.mxu0 %v805
      %816 = vmatprep.subr.bf16.mxu0 0
      %817 = vmatpush1.bf16.msra.mxu0 %v804
      %818 = vmatprep.subr.bf16.mxu0 0
      %819 = vmatpush1.bf16.msra.mxu0 %v803
      %820 = vmatprep.subr.bf16.mxu0 0
      %821 = vmatpush1.bf16.msra.mxu0 %v802
      %822 = vmatprep.subr.bf16.mxu0 0
      %823 = vmatpush1.bf16.msra.mxu0 %v801
      %824 = vmatprep.subr.bf16.mxu0 0
      %825 = vmatpush1.bf16.msra.mxu0 %v800
      %826 = vmatprep.subr.bf16.mxu0 0
      %827 = vmatpush1.bf16.msra.mxu0 %v799
      %828 = vmatprep.subr.bf16.mxu0 0
      %829 = vmatpush1.bf16.msra.mxu0 %v798
      %830 = vmatprep.subr.bf16.mxu0 0
      %831 = vmatpush2.bf16.msra.mxu0 0
      %832 = vmatprep.subr.bf16.mxu0 0
      %833 = vmatpush2.bf16.msra.mxu0 0
      %834 = vmatprep.subr.bf16.mxu0 0
      %835 = vmatpush2.bf16.msra.mxu0 0
      %836 = vmatprep.subr.bf16.mxu0 0
      %837 = vmatpush2.bf16.msra.mxu0 0
      %838 = vmatprep.subr.bf16.mxu0 0
      %839 = vmatpush2.bf16.msra.mxu0 0
      %840 = vmatprep.subr.bf16.mxu0 0
      %841 = vmatpush2.bf16.msra.mxu0 0
      %842 = vmatprep.subr.bf16.mxu0 0
      %843 = vmatpush2.bf16.msra.mxu0 0
      %844 = vmatprep.subr.bf16.mxu0 0
      %845 = vmatpush2.bf16.msra.mxu0 0
      %846 = vmatprep.mubr.bf16.mxu0 0
      %847 = vmatmul.mubr.bf16.gmra.mxu0 %v745
      %v848 = vpop.f32.mrf.mxu0
      %v849 = vadd.f32 0.0, %v848
      %v850 = vpop.f32.mrf.mxu0
      %v851 = vpop.f32.mrf.mxu0
      %v852 = vadd.f32 0.0, %v851
      %v853 = vpop.f32.mrf.mxu0
      %854 = vmatprep.mubr.bf16.mxu0 0
      %855 = vmatmul.mubr.bf16.gmra.mxu0 %v746
      %v856 = vpop.f32.mrf.mxu0
      %v857 = vadd.f32 0.0, %v856
      %v858 = vpop.f32.mrf.mxu0
      %v859 = vpop.f32.mrf.mxu0
      %v860 = vadd.f32 0.0, %v859
      %v861 = vpop.f32.mrf.mxu0
      %862 = vmatprep.mubr.bf16.mxu0 0
      %863 = vmatmul.mubr.bf16.gmra.mxu0 %v747
      %v864 = vpop.f32.mrf.mxu0
      %v865 = vadd.f32 0.0, %v864
      %v866 = vpop.f32.mrf.mxu0
      %v867 = vpop.f32.mrf.mxu0
      %v868 = vadd.f32 0.0, %v867
      %v869 = vpop.f32.mrf.mxu0
      %870 = vmatprep.mubr.bf16.mxu0 0
      %871 = vmatmul.mubr.bf16.gmra.mxu0 %v748
      %v872 = vpop.f32.mrf.mxu0
      %v873 = vadd.f32 0.0, %v872
      %v874 = vpop.f32.mrf.mxu0
      %v875 = vpop.f32.mrf.mxu0
      %v876 = vadd.f32 0.0, %v875
      %v877 = vpop.f32.mrf.mxu0
      %878 = vdwg.mxu0
      %v879 = vadd.f32 %v715, %v849
      %v880 = vadd.f32 %v718, %v852
      %v881 = vadd.f32 %v723, %v857
      %v882 = vadd.f32 %v726, %v860
      %v883 = vadd.f32 %v731, %v865
      %v884 = vadd.f32 %v734, %v868
      %v885 = vadd.f32 %v739, %v873
      %v886 = vadd.f32 %v742, %v876
      %v887 = vld [vmem:[%s3] sm:$0x1]
      %v889 = vlaneseq
      %v890 = vshrl.u32 %v889, 7
      %v891 = vsub.s32 0, %v890
      %v892 = vrot.slane %v887, %v891
      %v894 = vadd.f32 %v879, %v892
      %v895 = vadd.f32 %v880, %v892
      %v896 = vadd.f32 %v881, %v892
      %v897 = vadd.f32 %v882, %v892
      %v898 = vadd.f32 %v883, %v892
      %v899 = vadd.f32 %v884, %v892
      %v900 = vadd.f32 %v885, %v892
      %v901 = vadd.f32 %v886, %v892
      %v902 = vxor.u32 %v894, 2147483648
      %v903 = vxor.u32 %v895, 2147483648
      %v904 = vxor.u32 %v896, 2147483648
      %v905 = vxor.u32 %v897, 2147483648
      %v906 = vxor.u32 %v898, 2147483648
      %v907 = vxor.u32 %v899, 2147483648
      %v908 = vxor.u32 %v900, 2147483648
      %v909 = vxor.u32 %v901, 2147483648
      %v910 = vmul.f32 %v902, 1.442695
      %v911 = vpow.pop %v910
      %v912 = vmul.f32 %v903, 1.442695
      %v913 = vpow.pop %v912
      %v914 = vmul.f32 %v904, 1.442695
      %v915 = vpow.pop %v914
      %v916 = vmul.f32 %v905, 1.442695
      %v917 = vpow.pop %v916
      %v918 = vmul.f32 %v906, 1.442695
      %v919 = vpow.pop %v918
      %v920 = vmul.f32 %v907, 1.442695
      %v921 = vpow.pop %v920
      %v922 = vmul.f32 %v908, 1.442695
      %v923 = vpow.pop %v922
      %v924 = vmul.f32 %v909, 1.442695
      %v925 = vpow.pop %v924
      %v926 = vadd.f32 %v911, 1.0
      %v927 = vadd.f32 %v913, 1.0
      %v928 = vadd.f32 %v915, 1.0
      %v929 = vadd.f32 %v917, 1.0
      %v930 = vadd.f32 %v919, 1.0
      %v931 = vadd.f32 %v921, 1.0
      %v932 = vadd.f32 %v923, 1.0
      %v933 = vadd.f32 %v925, 1.0
      %v934 = vrcp.pop %v926
      %v935 = vmul.f32 1.0, %v934
      %v936 = vrcp.pop %v927
      %v937 = vmul.f32 1.0, %v936
      %v938 = vrcp.pop %v928
      %v939 = vmul.f32 1.0, %v938
      %v940 = vrcp.pop %v929
      %v941 = vmul.f32 1.0, %v940
      %v942 = vrcp.pop %v930
      %v943 = vmul.f32 1.0, %v942
      %v944 = vrcp.pop %v931
      %v945 = vmul.f32 1.0, %v944
      %v946 = vrcp.pop %v932
      %v947 = vmul.f32 1.0, %v946
      %v948 = vrcp.pop %v933
      %v949 = vmul.f32 1.0, %v948
      %v950 = vmul.f32 %v894, %v935
      %v951 = vmul.f32 %v895, %v937
      %v952 = vmul.f32 %v896, %v939
      %v953 = vmul.f32 %v897, %v941
      %v954 = vmul.f32 %v898, %v943
      %v955 = vmul.f32 %v899, %v945
      %v956 = vmul.f32 %v900, %v947
      %v957 = vmul.f32 %v901, %v949
      %v958 = vpack.c.bf16 %v951, %v950
      %v959 = vpack.c.bf16 %v953, %v952
      %v960 = vpack.c.bf16 %v955, %v954
      %v961 = vpack.c.bf16 %v957, %v956
      %v962 = vld [vmem:[%s4] sm:$0xf]
      %v963 = vld [vmem:[%s4 + $0x4] sm:$0xf]
      %v964 = vld [vmem:[%s4 + $0x8] sm:$0xf]
      %v965 = vld [vmem:[%s4 + $0xc] sm:$0xf]
      %v966 = vld [vmem:[%s4 + $0x10] sm:$0xf]
      %v967 = vld [vmem:[%s4 + $0x14] sm:$0xf]
      %v968 = vld [vmem:[%s4 + $0x18] sm:$0xf]
      %v969 = vld [vmem:[%s4 + $0x1c] sm:$0xf]
      %v970 = vld [vmem:[%s4 + $0x20] sm:$0xf]
      %v971 = vld [vmem:[%s4 + $0x24] sm:$0xf]
      %v972 = vld [vmem:[%s4 + $0x28] sm:$0xf]
      %v973 = vld [vmem:[%s4 + $0x2c] sm:$0xf]
      %v974 = vld [vmem:[%s4 + $0x30] sm:$0xf]
      %v975 = vld [vmem:[%s4 + $0x34] sm:$0xf]
      %v976 = vld [vmem:[%s4 + $0x38] sm:$0xf]
      %v977 = vld [vmem:[%s4 + $0x3c] sm:$0xf]
      %v978 = vld [vmem:[%s5] sm:$0x1]
      %v980 = vlaneseq
      %v981 = vshrl.u32 %v980, 7
      %v982 = vsub.s32 0, %v981
      %v983 = vrot.slane %v978, %v982
      %v1001 = vunpack.c.l.b16 %v962
      %v1002 = vunpack.c.l.b16 %v963
      %v1003 = vunpack.c.l.b16 %v964
      %v1004 = vunpack.c.l.b16 %v965
      %v1005 = vunpack.c.l.b16 %v966
      %v1006 = vunpack.c.l.b16 %v967
      %v1007 = vunpack.c.l.b16 %v968
      %v1008 = vunpack.c.l.b16 %v969
      %v1009 = vunpack.c.l.b16 %v970
      %v1010 = vunpack.c.l.b16 %v971
      %v1011 = vunpack.c.l.b16 %v972
      %v1012 = vunpack.c.l.b16 %v973
      %v1013 = vunpack.c.l.b16 %v974
      %v1014 = vunpack.c.l.b16 %v975
      %v1015 = vunpack.c.l.b16 %v976
      %v1016 = vunpack.c.l.b16 %v977
      %v1017 = vpack.c.b16 %v1002, %v1001
      %v1018 = vpack.c.b16 %v1004, %v1003
      %v1019 = vpack.c.b16 %v1006, %v1005
      %v1020 = vpack.c.b16 %v1008, %v1007
      %v1021 = vpack.c.b16 %v1010, %v1009
      %v1022 = vpack.c.b16 %v1012, %v1011
      %v1023 = vpack.c.b16 %v1014, %v1013
      %v1024 = vpack.c.b16 %v1016, %v1015
      %1033 = vmatprep.subr.bf16.mxu0 0
      %1034 = vmatpush1.bf16.msra.mxu0 %v1024
      %1035 = vmatprep.subr.bf16.mxu0 0
      %1036 = vmatpush1.bf16.msra.mxu0 %v1023
      %1037 = vmatprep.subr.bf16.mxu0 0
      %1038 = vmatpush1.bf16.msra.mxu0 %v1022
      %1039 = vmatprep.subr.bf16.mxu0 0
      %1040 = vmatpush1.bf16.msra.mxu0 %v1021
      %1041 = vmatprep.subr.bf16.mxu0 0
      %1042 = vmatpush1.bf16.msra.mxu0 %v1020
      %1043 = vmatprep.subr.bf16.mxu0 0
      %1044 = vmatpush1.bf16.msra.mxu0 %v1019
      %1045 = vmatprep.subr.bf16.mxu0 0
      %1046 = vmatpush1.bf16.msra.mxu0 %v1018
      %1047 = vmatprep.subr.bf16.mxu0 0
      %1048 = vmatpush1.bf16.msra.mxu0 %v1017
      %1049 = vmatprep.subr.bf16.mxu0 0
      %1050 = vmatpush2.bf16.msra.mxu0 0
      %1051 = vmatprep.subr.bf16.mxu0 0
      %1052 = vmatpush2.bf16.msra.mxu0 0
      %1053 = vmatprep.subr.bf16.mxu0 0
      %1054 = vmatpush2.bf16.msra.mxu0 0
      %1055 = vmatprep.subr.bf16.mxu0 0
      %1056 = vmatpush2.bf16.msra.mxu0 0
      %1057 = vmatprep.subr.bf16.mxu0 0
      %1058 = vmatpush2.bf16.msra.mxu0 0
      %1059 = vmatprep.subr.bf16.mxu0 0
      %1060 = vmatpush2.bf16.msra.mxu0 0
      %1061 = vmatprep.subr.bf16.mxu0 0
      %1062 = vmatpush2.bf16.msra.mxu0 0
      %1063 = vmatprep.subr.bf16.mxu0 0
      %1064 = vmatpush2.bf16.msra.mxu0 0
      %1065 = vmatprep.mubr.bf16.mxu0 0
      %1066 = vmatmul.mubr.bf16.gmra.mxu0 %v958
      %v1067 = vpop.f32.mrf.mxu0
      %v1068 = vadd.f32 %v983, %v1067
      %v1069 = vpop.f32.mrf.mxu0
      %v1070 = vpop.f32.mrf.mxu0
      %v1071 = vadd.f32 %v983, %v1070
      %v1072 = vpop.f32.mrf.mxu0
      %1073 = vmatprep.mubr.bf16.mxu0 0
      %1074 = vmatmul.mubr.bf16.gmra.mxu0 %v959
      %v1075 = vpop.f32.mrf.mxu0
      %v1076 = vadd.f32 %v983, %v1075
      %v1077 = vpop.f32.mrf.mxu0
      %v1078 = vpop.f32.mrf.mxu0
      %v1079 = vadd.f32 %v983, %v1078
      %v1080 = vpop.f32.mrf.mxu0
      %1081 = vmatprep.mubr.bf16.mxu0 0
      %1082 = vmatmul.mubr.bf16.gmra.mxu0 %v960
      %v1083 = vpop.f32.mrf.mxu0
      %v1084 = vadd.f32 %v983, %v1083
      %v1085 = vpop.f32.mrf.mxu0
      %v1086 = vpop.f32.mrf.mxu0
      %v1087 = vadd.f32 %v983, %v1086
      %v1088 = vpop.f32.mrf.mxu0
      %1089 = vmatprep.mubr.bf16.mxu0 0
      %1090 = vmatmul.mubr.bf16.gmra.mxu0 %v961
      %v1091 = vpop.f32.mrf.mxu0
      %v1092 = vadd.f32 %v983, %v1091
      %v1093 = vpop.f32.mrf.mxu0
      %v1094 = vpop.f32.mrf.mxu0
      %v1095 = vadd.f32 %v983, %v1094
      %v1096 = vpop.f32.mrf.mxu0
      %1097 = vdwg.mxu0
      %v1098 = vadd.f32 %v1068, %v323
      %v1099 = vadd.f32 %v1071, %v324
      %v1100 = vadd.f32 %v1076, %v325
      %v1101 = vadd.f32 %v1079, %v326
      %v1102 = vadd.f32 %v1084, %v327
      %v1103 = vadd.f32 %v1087, %v328
      %v1104 = vadd.f32 %v1092, %v329
      %v1105 = vadd.f32 %v1095, %v330
      %1106 = vst [vmem:[%s320] sm:$0xff] %v1098
      %1107 = vst [vmem:[%s320 + $0x8] sm:$0xff] %v1099
      %1108 = vst [vmem:[%s320 + $0x10] sm:$0xff] %v1100
      %1109 = vst [vmem:[%s320 + $0x18] sm:$0xff] %v1101
      %1110 = vst [vmem:[%s320 + $0x20] sm:$0xff] %v1102
      %1111 = vst [vmem:[%s320 + $0x28] sm:$0xff] %v1103
      %1112 = vst [vmem:[%s320 + $0x30] sm:$0xff] %v1104
      %1113 = vst [vmem:[%s320 + $0x38] sm:$0xff] %v1105
      %s1114 = smul.u32 8, %s22
      %p1115 = scmp.lt.s32.totalorder %s21, 1
      %s1116 = scalar_select %p1115, %s21, 1
      %p1117 = scmp.lt.s32.totalorder %s1114, 23
      %s1118 = scalar_select %p1117, %s1114, 23
      %s1119 = smul.addr %s1116, 24
      %s1120 = sadd.s32 %s1118, %s1119
      %s1121 = smul.addr %s1120, 8
      %s1122 = scalar_lea.vmem %s6, %s1121
      // Predicated region
      $region45: #{resconv1d_block.1} parent=43 // pred_check
        %p1123 = pneg %p189
      $region46: #{resconv1d_block.1} parent=43 // pred_check_branch
        %1125 = sbr.rel (%p1123) target = $region48
      $region47: #{resconv1d_block.1} parent=43 // pred_region
        %s1126 = smul.u32 8, %s22
      $region48: #{resconv1d_block.1} parent=43 // pred_fallthru
        _
    $region44: #{resconv1d_block.1} parent=5 // pred_fallthru
      _
    %p1127 = scmp.le.s32.totalorder 2, %s12
    // Predicated region
    $region49: #{resconv1d_block.1} parent=5 // pred_check
      %p1128 = pneg %p1127
    $region50: #{resconv1d_block.1} parent=5 // pred_check_branch
      %1130 = sbr.rel (%p1128) target = $region52
    $region51: #{resconv1d_block.1} parent=5 // pred_region
      %s1131 = ssub.s32 %s12, 2
      // Predicated region
      $region53: #{resconv1d_block.1} parent=51 // pred_check
        %p1132 = pneg %p195
      $region54: #{resconv1d_block.1} parent=51 // pred_check_branch
        %1134 = sbr.rel (%p1132) target = $region56
      $region55: #{resconv1d_block.1} parent=51 // pred_region
        %s1135 = smul.u32 8, %s24
        %p1136 = scmp.lt.s32.totalorder %s23, 1
        %s1137 = scalar_select %p1136, %s23, 1
        %p1138 = scmp.lt.s32.totalorder %s1135, 23
        %s1139 = scalar_select %p1138, %s1135, 23
        %s1140 = smul.addr %s1137, 24
        %s1141 = sadd.s32 %s1139, %s1140
        %s1142 = smul.addr %s1141, 8
        %s1143 = scalar_lea.vmem %s6, %s1142
      $region56: #{resconv1d_block.1} parent=51 // pred_fallthru
        _
    $region52: #{resconv1d_block.1} parent=5 // pred_fallthru
      _
  $region6: #{resconv1d_block.1} parent=0 // loop_footer
    %s16 = sadd.s32 1, %s12
  $region7: #{resconv1d_block.1} parent=0 // loop_footer_branch
    %11 = sbr.rel target = $region3
  $region8: #{resconv1d_block.1} parent=0 // loop_exit
    _

</llo_original>
